<compile_context>
chip_gen: v5e
topology: v5e:2x2
jax: 0.10.0
libtpu: 0.0.40
codegen_flags: <defaults>
</compile_context>

<pallas_src>
import jax
import jax.numpy as jnp
from jax.experimental import pallas as pl
from jax.experimental.pallas import tpu as pltpu


def _round_up(x, m):
    return (x + m - 1) // m * m


def _yolo_head_kernel(x_ref, delta_ref, conf_ref, logit_ref):
    """x_ref block: (B, K, HW), K = 5 + num_classes."""
    x = x_ref[...]  # one dense load of the tile in its native dtype

    # bbox deltas, channels 0..3 = (tx, ty, tw, th).
    # tx, ty -> sigmoid - 0.5 ; tw, th -> raw passthrough (no wasted sigmoid,
    # no iota/select; static slices, masked stores only on this 4-sublane
    # group which is a small fraction of total bytes).
    txy = jax.nn.sigmoid(x[:, 0:2, :].astype(jnp.float32)) - 0.5
    delta_ref[:, 0:2, :] = txy.astype(delta_ref.dtype)
    delta_ref[:, 2:4, :] = x[:, 2:4, :]

    # objectness confidence (channel 4): lane/sublane-dense 2-D output block.
    conf = jax.nn.sigmoid(x[:, 4, :].astype(jnp.float32))
    conf_ref[...] = conf.astype(conf_ref.dtype)

    # class scores (channels 5..): sigmoid (YoloV3 multi-label, as in the
    # reference PyTorch forward).
    logit = jax.nn.sigmoid(x[:, 5:, :].astype(jnp.float32))
    logit_ref[...] = logit.astype(logit_ref.dtype)


def _choose_block_rows(NA, K, num_classes, HW, itemsize):
    """Rows (of the (N*A, K, HW) view) processed per grid step.

    Constraints:
      * B divides NA exactly (no ragged trailing block);
      * B is a multiple of 8 (dense sublanes for the 2-D conf block) or B==NA
        (full-extent block, always legal).
    Preference: largest B whose double-buffered in+out VMEM footprint stays
    under ~16 MiB (comfortable even on v7x's 64 MiB VMEM), while keeping >=2
    grid steps when possible so megacore can split the 'parallel' axis.
    """
    budget = 16 * 1024 * 1024
    lanes = _round_up(HW, 128)
    # Padded per-row VMEM bytes for one buffer set (input + 3 outputs).
    per_row = (_round_up(K, 8) + 8 + 1 + _round_up(num_classes, 8)) * lanes * itemsize
    max_rows = max(1, budget // (2 * per_row))  # x2: double buffering

    candidates = [b for b in range(1, NA + 1)
                  if NA % b == 0 and (b % 8 == 0 or b == NA)]
    fitting = [b for b in candidates if b <= max_rows]
    if fitting:
        multi_step = [b for b in fitting if b < NA]
        return max(multi_step) if multi_step else max(fitting)
    return min(candidates)


def yolo_head_level(feature, *, num_classes, num_anchors):
    N, C, H, W = feature.shape
    K = 5 + num_classes
    assert C == num_anchors * K, "channel dim must be num_anchors*(5+num_classes)"
    HW = H * W
    NA = N * num_anchors
    itemsize = jnp.dtype(feature.dtype).itemsize

    # TODO(synk): levels with HW < 128 (e.g. 8x8) underfill vector lanes;
    # padding HW to a multiple of 128 or fusing small levels into one
    # pallas_call would help if those levels ever dominate.

    x = feature.reshape(NA, K, HW)  # pure view of the NCHW tensor

    B = _choose_block_rows(NA, K, num_classes, HW, itemsize)
    G = NA // B

    out_shapes = (
        jax.ShapeDtypeStruct((NA, 4, HW), feature.dtype),            # deltas
        jax.ShapeDtypeStruct((NA, HW), feature.dtype),               # confs (2-D, dense)
        jax.ShapeDtypeStruct((NA, num_classes, HW), feature.dtype),  # logits
    )

    # Explicit scoped-VMEM budget: double-buffered (in + 3 outs) with (8,128)
    # tile padding, plus margin; clamped to stay inside v7x's 64 MiB VMEM.
    lanes = _round_up(HW, 128)
    per_buf = (B * _round_up(K, 8) + B * 8 + _round_up(B, 8)
               + B * _round_up(num_classes, 8)) * lanes * itemsize
    vmem_limit = int(min(max(4 * per_buf, 32 * 1024 * 1024), 64 * 1024 * 1024))

    delta, conf, logit = pl.pallas_call(
        _yolo_head_kernel,
        out_shape=out_shapes,
        grid_spec=pltpu.PrefetchScalarGridSpec(
            num_scalar_prefetch=0,
            grid=(G,),
            in_specs=[pl.BlockSpec((B, K, HW), lambda i: (i, 0, 0))],
            out_specs=[
                pl.BlockSpec((B, 4, HW), lambda i: (i, 0, 0)),
                pl.BlockSpec((B, HW), lambda i: (i, 0)),
                pl.BlockSpec((B, num_classes, HW), lambda i: (i, 0, 0)),
            ],
        ),
        compiler_params=pltpu.CompilerParams(
            dimension_semantics=("parallel",),
            vmem_limit_bytes=vmem_limit,
        ),
    )(x)

    # Reshape back to the PyTorch output layouts (contiguous views, no copy):
    pred_anchor_deltas = delta.reshape(N, num_anchors * 4, H, W)
    pred_confs = conf.reshape(N, num_anchors, H, W)
    pred_logits = logit.reshape(N, num_anchors * num_classes, H, W)
    return pred_logits, pred_confs, pred_anchor_deltas


def yolo_v3_head(features, *, num_classes, num_anchors):
    """Pallas equivalent of YoloV3Head.forward (list of features in, 3 lists out)."""
    pred_logits, pred_confs, pred_anchor_deltas = [], [], []
    for f in features:
        lg, cf, dl = yolo_head_level(
            f, num_classes=num_classes, num_anchors=num_anchors)
        pred_logits.append(lg)
        pred_confs.append(cf)
        pred_anchor_deltas.append(dl)
    return pred_logits, pred_confs, pred_anchor_deltas


def _ref_level(feature, *, num_classes, num_anchors):
    """Pure-JAX reference mirroring the PyTorch code exactly."""
    N, C, H, W = feature.shape
    f = feature.reshape(N, num_anchors, -1, H, W)
    delta = f[:, :, :4].reshape(N, -1, H, W)
    confs = jax.nn.sigmoid(f[:, :, 4:5].reshape(N, -1, H, W))
    logits = jax.nn.sigmoid(f[:, :, 5:].reshape(N, -1, H, W))
    delta = delta.at[:, 0::4].set(jax.nn.sigmoid(delta[:, 0::4]) - 0.5)
    delta = delta.at[:, 1::4].set(jax.nn.sigmoid(delta[:, 1::4]) - 0.5)
    return logits, confs, delta


if __name__ == "__main__":
    num_classes = 3
    num_anchors = 3
    N = 2
    C = num_anchors * (5 + num_classes)  # 24

    key = jax.random.PRNGKey(0)
    k1, k2 = jax.random.split(key)
    # Two FPN levels (YoloV3 normally has 3; two small ones suffice here).
    features = [
        jax.random.normal(k1, (N, C, 16, 16), dtype=jnp.float32),
        jax.random.normal(k2, (N, C, 8, 8), dtype=jnp.float32),
    ]

    pred_logits, pred_confs, pred_deltas = yolo_v3_head(
        features, num_classes=num_classes, num_anchors=num_anchors)
    jax.block_until_ready((pred_logits, pred_confs, pred_deltas))

    # Verify against a pure-JAX reference of the PyTorch forward.
    for f, lg, cf, dl in zip(features, pred_logits, pred_confs, pred_deltas):
        rlg, rcf, rdl = _ref_level(
            f, num_classes=num_classes, num_anchors=num_anchors)
        assert lg.shape == rlg.shape and cf.shape == rcf.shape and dl.shape == rdl.shape
        assert jnp.allclose(lg, rlg, atol=1e-6), "logits mismatch"
        assert jnp.allclose(cf, rcf, atol=1e-6), "confs mismatch"
        assert jnp.allclose(dl, rdl, atol=1e-6), "deltas mismatch"

    print("KERNEL_OK")
</pallas_src>

<mosaic_0001>
module attributes {stable_mosaic.version = 11 : i64} {
  func.func @_yolo_head_kernel(%arg0: i32, %arg1: memref<6x8x256xf32, #tpu.memory_space<vmem>>, %arg2: memref<6x4x256xf32, #tpu.memory_space<vmem>>, %arg3: memref<6x256xf32, #tpu.memory_space<vmem>>, %arg4: memref<6x3x256xf32, #tpu.memory_space<vmem>>) attributes {dimension_semantics = [#tpu.dimension_semantics<parallel>], iteration_bounds = array<i64: 1>, scalar_prefetch = 0 : i64, scratch_operands = 0 : i64, tpu.core_type = #tpu.core_type<tc>, window_params = [{transform_indices = @transform_0, window_bounds = array<i64: 6, 8, 256>}, {transform_indices = @transform_1, window_bounds = array<i64: 6, 4, 256>}, {transform_indices = @transform_2, window_bounds = array<i64: 6, 256>}, {transform_indices = @transform_3, window_bounds = array<i64: 6, 3, 256>}]} {
    %c0 = arith.constant 0 : index
    %c0_0 = arith.constant 0 : index
    %c0_1 = arith.constant 0 : index
    %0 = vector.load %arg1[%c0, %c0_0, %c0_1] : memref<6x8x256xf32, #tpu.memory_space<vmem>>, vector<6x8x256xf32>
    %1 = vector.extract_strided_slice %0 {offsets = [0, 0, 0], sizes = [6, 2, 256], strides = [1, 1, 1]} : vector<6x8x256xf32> to vector<6x2x256xf32>
    %2 = arith.negf %1 : vector<6x2x256xf32>
    %3 = math.exp %2 : vector<6x2x256xf32>
    %cst = arith.constant 1.000000e+00 : f32
    %4 = vector.broadcast %cst : f32 to vector<6x2x256xf32>
    %5 = arith.addf %4, %3 : vector<6x2x256xf32>
    %6 = arith.divf %4, %5 : vector<6x2x256xf32>
    %cst_2 = arith.constant 5.000000e-01 : f32
    %7 = vector.broadcast %cst_2 : f32 to vector<6x2x256xf32>
    %8 = arith.subf %6, %7 : vector<6x2x256xf32>
    %c0_3 = arith.constant 0 : index
    %c0_4 = arith.constant 0 : index
    %c0_5 = arith.constant 0 : index
    %9 = vector.load %arg2[%c0_3, %c0_4, %c0_5] : memref<6x4x256xf32, #tpu.memory_space<vmem>>, vector<6x2x256xf32>
    tpu.vector_store %arg2[%c0_3, %c0_4, %c0_5], %8 {strides = array<i32>} : memref<6x4x256xf32, #tpu.memory_space<vmem>>, vector<6x2x256xf32>,
    %10 = vector.extract_strided_slice %0 {offsets = [0, 2, 0], sizes = [6, 2, 256], strides = [1, 1, 1]} : vector<6x8x256xf32> to vector<6x2x256xf32>
    %c0_6 = arith.constant 0 : index
    %c2 = arith.constant 2 : index
    %c0_7 = arith.constant 0 : index
    %11 = vector.load %arg2[%c0_6, %c2, %c0_7] : memref<6x4x256xf32, #tpu.memory_space<vmem>>, vector<6x2x256xf32>
    tpu.vector_store %arg2[%c0_6, %c2, %c0_7], %10 {strides = array<i32>} : memref<6x4x256xf32, #tpu.memory_space<vmem>>, vector<6x2x256xf32>,
    %12 = vector.extract_strided_slice %0 {offsets = [0, 4, 0], sizes = [6, 1, 256], strides = [1, 1, 1]} : vector<6x8x256xf32> to vector<6x1x256xf32>
    %13 = vector.shape_cast %12 : vector<6x1x256xf32> to vector<6x256xf32>
    %14 = arith.negf %13 : vector<6x256xf32>
    %15 = math.exp %14 : vector<6x256xf32>
    %cst_8 = arith.constant 1.000000e+00 : f32
    %16 = vector.broadcast %cst_8 : f32 to vector<6x256xf32>
    %17 = arith.addf %16, %15 : vector<6x256xf32>
    %18 = arith.divf %16, %17 : vector<6x256xf32>
    %c0_9 = arith.constant 0 : index
    %c0_10 = arith.constant 0 : index
    %19 = vector.load %arg3[%c0_9, %c0_10] : memref<6x256xf32, #tpu.memory_space<vmem>>, vector<6x256xf32>
    tpu.vector_store %arg3[%c0_9, %c0_10], %18 {strides = array<i32>} : memref<6x256xf32, #tpu.memory_space<vmem>>, vector<6x256xf32>,
    %20 = vector.extract_strided_slice %0 {offsets = [0, 5, 0], sizes = [6, 3, 256], strides = [1, 1, 1]} : vector<6x8x256xf32> to vector<6x3x256xf32>
    %21 = arith.negf %20 : vector<6x3x256xf32>
    %22 = math.exp %21 : vector<6x3x256xf32>
    %cst_11 = arith.constant 1.000000e+00 : f32
    %23 = vector.broadcast %cst_11 : f32 to vector<6x3x256xf32>
    %24 = arith.addf %23, %22 : vector<6x3x256xf32>
    %25 = arith.divf %23, %24 : vector<6x3x256xf32>
    %c0_12 = arith.constant 0 : index
    %c0_13 = arith.constant 0 : index
    %c0_14 = arith.constant 0 : index
    %26 = vector.load %arg4[%c0_12, %c0_13, %c0_14] : memref<6x3x256xf32, #tpu.memory_space<vmem>>, vector<6x3x256xf32>
    tpu.vector_store %arg4[%c0_12, %c0_13, %c0_14], %25 {strides = array<i32>} : memref<6x3x256xf32, #tpu.memory_space<vmem>>, vector<6x3x256xf32>,
    return
  }
  func.func @transform_0(%arg0: i32) -> (i32, i32, i32) {
    %c0_i32 = arith.constant 0 : i32
    %c0_i32_0 = arith.constant 0 : i32
    %c0_i32_1 = arith.constant 0 : i32
    return %arg0, %c0_i32, %c0_i32_0 : i32, i32, i32
  }
  func.func @transform_1(%arg0: i32) -> (i32, i32, i32) {
    %c0_i32 = arith.constant 0 : i32
    %c0_i32_0 = arith.constant 0 : i32
    %c0_i32_1 = arith.constant 0 : i32
    return %arg0, %c0_i32, %c0_i32_0 : i32, i32, i32
  }
  func.func @transform_2(%arg0: i32) -> (i32, i32) {
    %c0_i32 = arith.constant 0 : i32
    %c0_i32_0 = arith.constant 0 : i32
    return %arg0, %c0_i32 : i32, i32
  }
  func.func @transform_3(%arg0: i32) -> (i32, i32, i32) {
    %c0_i32 = arith.constant 0 : i32
    %c0_i32_0 = arith.constant 0 : i32
    %c0_i32_1 = arith.constant 0 : i32
    return %arg0, %c0_i32, %c0_i32_0 : i32, i32, i32
  }
}

</mosaic_0001>

<llo_original>
// kernel: tpu_custom_call.1
$region0: #{tpu_custom_call.1}
  #allocation0 [shape = 'u32[]', space=smem, size = 0x4, offset = 0x4, fixed_abs, tag = 'smem constant byte address 0x4 - core index']
  #allocation1 [shape = 'u32[72,128]{1,0:T(1,128)}', space=vmem, size = 0x9000, scoped, tag = 'internal scratch']
  %s0 = inlined_call_operand.hbm [shape: f32[6,8,256], index: 0, kind: input, shape index: {}]
  %s1 = inlined_call_operand.hbm [shape: f32[6,4,256], index: 1, kind: output, shape index: {0}]
  %s2 = inlined_call_operand.hbm [shape: f32[6,256], index: 2, kind: output, shape index: {1}]
  %s3 = inlined_call_operand.hbm [shape: f32[6,3,256], index: 3, kind: output, shape index: {2}]
  %4 = xla_tuple %s1, %s2, %s3
  %s5 = sld [smem:[#allocation0]]
  $region34: #{tpu_custom_call.1} parent=0
    _
  %s7 = ssub.s32 1, %s5
  %s8 = scalar_select 0, %s7, %s5
  $region1: #{tpu_custom_call.1} parent=0
    #allocation2 [shape = 'u8[49152]{0}', space=vmem, size = 0xc000, scoped, tag = 'input window, operand 0, single buffered']
    #allocation3 [shape = 's32[1]{0}', space=sflag, size = 0x4, scoped, tag = 'scoped memory for tpu_custom_call.1']
    #allocation4 [shape = 's32[1]{0}', space=sflag, size = 0x4, scoped, tag = 'scoped memory for tpu_custom_call.1']
    #allocation5 [shape = 'u8[24576]{0}', space=vmem, size = 0x6000, scoped, tag = 'output window, operand 0, single buffered']
    #allocation6 [shape = 'u8[8192]{0}', space=vmem, size = 0x2000, scoped, tag = 'output window, operand 1, single buffered']
    #allocation7 [shape = 's32[1]{0}', space=sflag, size = 0x4, scoped, tag = 'scoped memory for tpu_custom_call.1']
    #allocation8 [shape = 'u8[24576]{0}', space=vmem, size = 0x6000, scoped, tag = 'output window, operand 2, single buffered']
    %9 = vsyncpa [#allocation3], 0
    %10 = vsyncpa [#allocation4], 0
    %11 = vsyncpa [#allocation7], 0
    // Predicated region
    $region2: #{tpu_custom_call.1} parent=1 // pred_check
      _
    $region3: #{tpu_custom_call.1} parent=1 // pred_check_branch
      %13 = sbr.rel (0) target = $region5
    $region4: #{tpu_custom_call.1} parent=1 // pred_region
      %15 = vsyncadd [#allocation3], 0
      %s16 = sshll.u32 %s0, 4
      %s17 = int_to_ptr.hbm [resolvable:$true] %s16
      %s18 = sshll.u32 [#allocation2], 4
      %s19 = int_to_ptr.vmem [resolvable:$true] %s18
      %24 = dma.hbm_to_vmem [thread:$0]  %s17, 1536, %s19, [#allocation3], 256, 256, 16
    $region5: #{tpu_custom_call.1} parent=1 // pred_fallthru
      _
    // Predicated region
    $region6: #{tpu_custom_call.1} parent=1 // pred_check
      _
    $region7: #{tpu_custom_call.1} parent=1 // pred_check_branch
      %26 = sbr.rel (0) target = $region9
    $region8: #{tpu_custom_call.1} parent=1 // pred_region
      %28 = dma.done [#allocation3], 1536
    $region9: #{tpu_custom_call.1} parent=1 // pred_fallthru
      _
    %v29 = vld [vmem:[#allocation2] sm:$0xff]
    %v30 = vld [vmem:[#allocation2 + $0x8] sm:$0xff]
    %v31 = vld [vmem:[#allocation2 + $0x10] sm:$0xff]
    %v32 = vld [vmem:[#allocation2 + $0x18] sm:$0xff]
    %v33 = vld [vmem:[#allocation2 + $0x20] sm:$0xff]
    %v34 = vld [vmem:[#allocation2 + $0x28] sm:$0xff]
    %v35 = vld [vmem:[#allocation2 + $0x30] sm:$0xff]
    %v36 = vld [vmem:[#allocation2 + $0x38] sm:$0xff]
    %v37 = vld [vmem:[#allocation2 + $0x40] sm:$0xff]
    %v38 = vld [vmem:[#allocation2 + $0x48] sm:$0xff]
    %v39 = vld [vmem:[#allocation2 + $0x50] sm:$0xff]
    %v40 = vld [vmem:[#allocation2 + $0x58] sm:$0xff]
    %v41 = vxor.u32 %v29, 2147483648
    %v42 = vxor.u32 %v30, 2147483648
    %v43 = vxor.u32 %v31, 2147483648
    %v44 = vxor.u32 %v32, 2147483648
    %v45 = vxor.u32 %v33, 2147483648
    %v46 = vxor.u32 %v34, 2147483648
    %v47 = vxor.u32 %v35, 2147483648
    %v48 = vxor.u32 %v36, 2147483648
    %v49 = vxor.u32 %v37, 2147483648
    %v50 = vxor.u32 %v38, 2147483648
    %v51 = vxor.u32 %v39, 2147483648
    %v52 = vxor.u32 %v40, 2147483648
    %v53 = vmul.f32 %v41, 1.442695
    %v54 = vpow.pop %v53
    %v55 = vmul.f32 %v42, 1.442695
    %v56 = vpow.pop %v55
    %v57 = vmul.f32 %v43, 1.442695
    %v58 = vpow.pop %v57
    %v59 = vmul.f32 %v44, 1.442695
    %v60 = vpow.pop %v59
    %v61 = vmul.f32 %v45, 1.442695
    %v62 = vpow.pop %v61
    %v63 = vmul.f32 %v46, 1.442695
    %v64 = vpow.pop %v63
    %v65 = vmul.f32 %v47, 1.442695
    %v66 = vpow.pop %v65
    %v67 = vmul.f32 %v48, 1.442695
    %v68 = vpow.pop %v67
    %v69 = vmul.f32 %v49, 1.442695
    %v70 = vpow.pop %v69
    %v71 = vmul.f32 %v50, 1.442695
    %v72 = vpow.pop %v71
    %v73 = vmul.f32 %v51, 1.442695
    %v74 = vpow.pop %v73
    %v75 = vmul.f32 %v52, 1.442695
    %v76 = vpow.pop %v75
    %v77 = vadd.f32 %v54, 1.0
    %v78 = vadd.f32 %v56, 1.0
    %v79 = vadd.f32 %v58, 1.0
    %v80 = vadd.f32 %v60, 1.0
    %v81 = vadd.f32 %v62, 1.0
    %v82 = vadd.f32 %v64, 1.0
    %v83 = vadd.f32 %v66, 1.0
    %v84 = vadd.f32 %v68, 1.0
    %v85 = vadd.f32 %v70, 1.0
    %v86 = vadd.f32 %v72, 1.0
    %v87 = vadd.f32 %v74, 1.0
    %v88 = vadd.f32 %v76, 1.0
    %v89 = vrcp.pop %v77
    %v90 = vmul.f32 %v77, %v89
    %v91 = vsub.f32 1.0, %v90
    %v92 = vmul.f32 %v89, %v91
    %v93 = vadd.f32 %v89, %v92
    %vm94 = vweird.f32 %v77
    %vm95 = vweird.f32 %v89
    %vm96 = vmor %vm94, %vm95
    %v97 = vsel %vm96, %v89, %v93
    %v98 = vand.u32 2147483647, %v77
    %vm99 = vcmp.eq.f32.partialorder %v98, 8.507059e+37
    %v100 = vand.u32 %v77, 2147483648
    %v101 = vor.u32 1.1754944e-38, %v100
    %v102 = vsel %vm99, %v101, %v97
    %v103 = vmul.f32 1.0, %v102
    %v104 = vrcp.pop %v78
    %v105 = vmul.f32 %v78, %v104
    %v106 = vsub.f32 1.0, %v105
    %v107 = vmul.f32 %v104, %v106
    %v108 = vadd.f32 %v104, %v107
    %vm109 = vweird.f32 %v78
    %vm110 = vweird.f32 %v104
    %vm111 = vmor %vm109, %vm110
    %v112 = vsel %vm111, %v104, %v108
    %v113 = vand.u32 2147483647, %v78
    %vm114 = vcmp.eq.f32.partialorder %v113, 8.507059e+37
    %v115 = vand.u32 %v78, 2147483648
    %v116 = vor.u32 1.1754944e-38, %v115
    %v117 = vsel %vm114, %v116, %v112
    %v118 = vmul.f32 1.0, %v117
    %v119 = vrcp.pop %v79
    %v120 = vmul.f32 %v79, %v119
    %v121 = vsub.f32 1.0, %v120
    %v122 = vmul.f32 %v119, %v121
    %v123 = vadd.f32 %v119, %v122
    %vm124 = vweird.f32 %v79
    %vm125 = vweird.f32 %v119
    %vm126 = vmor %vm124, %vm125
    %v127 = vsel %vm126, %v119, %v123
    %v128 = vand.u32 2147483647, %v79
    %vm129 = vcmp.eq.f32.partialorder %v128, 8.507059e+37
    %v130 = vand.u32 %v79, 2147483648
    %v131 = vor.u32 1.1754944e-38, %v130
    %v132 = vsel %vm129, %v131, %v127
    %v133 = vmul.f32 1.0, %v132
    %v134 = vrcp.pop %v80
    %v135 = vmul.f32 %v80, %v134
    %v136 = vsub.f32 1.0, %v135
    %v137 = vmul.f32 %v134, %v136
    %v138 = vadd.f32 %v134, %v137
    %vm139 = vweird.f32 %v80
    %vm140 = vweird.f32 %v134
    %vm141 = vmor %vm139, %vm140
    %v142 = vsel %vm141, %v134, %v138
    %v143 = vand.u32 2147483647, %v80
    %vm144 = vcmp.eq.f32.partialorder %v143, 8.507059e+37
    %v145 = vand.u32 %v80, 2147483648
    %v146 = vor.u32 1.1754944e-38, %v145
    %v147 = vsel %vm144, %v146, %v142
    %v148 = vmul.f32 1.0, %v147
    %v149 = vrcp.pop %v81
    %v150 = vmul.f32 %v81, %v149
    %v151 = vsub.f32 1.0, %v150
    %v152 = vmul.f32 %v149, %v151
    %v153 = vadd.f32 %v149, %v152
    %vm154 = vweird.f32 %v81
    %vm155 = vweird.f32 %v149
    %vm156 = vmor %vm154, %vm155
    %v157 = vsel %vm156, %v149, %v153
    %v158 = vand.u32 2147483647, %v81
    %vm159 = vcmp.eq.f32.partialorder %v158, 8.507059e+37
    %v160 = vand.u32 %v81, 2147483648
    %v161 = vor.u32 1.1754944e-38, %v160
    %v162 = vsel %vm159, %v161, %v157
    %v163 = vmul.f32 1.0, %v162
    %v164 = vrcp.pop %v82
    %v165 = vmul.f32 %v82, %v164
    %v166 = vsub.f32 1.0, %v165
    %v167 = vmul.f32 %v164, %v166
    %v168 = vadd.f32 %v164, %v167
    %vm169 = vweird.f32 %v82
    %vm170 = vweird.f32 %v164
    %vm171 = vmor %vm169, %vm170
    %v172 = vsel %vm171, %v164, %v168
    %v173 = vand.u32 2147483647, %v82
    %vm174 = vcmp.eq.f32.partialorder %v173, 8.507059e+37
    %v175 = vand.u32 %v82, 2147483648
    %v176 = vor.u32 1.1754944e-38, %v175
    %v177 = vsel %vm174, %v176, %v172
    %v178 = vmul.f32 1.0, %v177
    %v179 = vrcp.pop %v83
    %v180 = vmul.f32 %v83, %v179
    %v181 = vsub.f32 1.0, %v180
    %v182 = vmul.f32 %v179, %v181
    %v183 = vadd.f32 %v179, %v182
    %vm184 = vweird.f32 %v83
    %vm185 = vweird.f32 %v179
    %vm186 = vmor %vm184, %vm185
    %v187 = vsel %vm186, %v179, %v183
    %v188 = vand.u32 2147483647, %v83
    %vm189 = vcmp.eq.f32.partialorder %v188, 8.507059e+37
    %v190 = vand.u32 %v83, 2147483648
    %v191 = vor.u32 1.1754944e-38, %v190
    %v192 = vsel %vm189, %v191, %v187
    %v193 = vmul.f32 1.0, %v192
    %v194 = vrcp.pop %v84
    %v195 = vmul.f32 %v84, %v194
    %v196 = vsub.f32 1.0, %v195
    %v197 = vmul.f32 %v194, %v196
    %v198 = vadd.f32 %v194, %v197
    %vm199 = vweird.f32 %v84
    %vm200 = vweird.f32 %v194
    %vm201 = vmor %vm199, %vm200
    %v202 = vsel %vm201, %v194, %v198
    %v203 = vand.u32 2147483647, %v84
    %vm204 = vcmp.eq.f32.partialorder %v203, 8.507059e+37
    %v205 = vand.u32 %v84, 2147483648
    %v206 = vor.u32 1.1754944e-38, %v205
    %v207 = vsel %vm204, %v206, %v202
    %v208 = vmul.f32 1.0, %v207
    %v209 = vrcp.pop %v85
    %v210 = vmul.f32 %v85, %v209
    %v211 = vsub.f32 1.0, %v210
    %v212 = vmul.f32 %v209, %v211
    %v213 = vadd.f32 %v209, %v212
    %vm214 = vweird.f32 %v85
    %vm215 = vweird.f32 %v209
    %vm216 = vmor %vm214, %vm215
    %v217 = vsel %vm216, %v209, %v213
    %v218 = vand.u32 2147483647, %v85
    %vm219 = vcmp.eq.f32.partialorder %v218, 8.507059e+37
    %v220 = vand.u32 %v85, 2147483648
    %v221 = vor.u32 1.1754944e-38, %v220
    %v222 = vsel %vm219, %v221, %v217
    %v223 = vmul.f32 1.0, %v222
    %v224 = vrcp.pop %v86
    %v225 = vmul.f32 %v86, %v224
    %v226 = vsub.f32 1.0, %v225
    %v227 = vmul.f32 %v224, %v226
    %v228 = vadd.f32 %v224, %v227
    %vm229 = vweird.f32 %v86
    %vm230 = vweird.f32 %v224
    %vm231 = vmor %vm229, %vm230
    %v232 = vsel %vm231, %v224, %v228
    %v233 = vand.u32 2147483647, %v86
    %vm234 = vcmp.eq.f32.partialorder %v233, 8.507059e+37
    %v235 = vand.u32 %v86, 2147483648
    %v236 = vor.u32 1.1754944e-38, %v235
    %v237 = vsel %vm234, %v236, %v232
    %v238 = vmul.f32 1.0, %v237
    %v239 = vrcp.pop %v87
    %v240 = vmul.f32 %v87, %v239
    %v241 = vsub.f32 1.0, %v240
    %v242 = vmul.f32 %v239, %v241
    %v243 = vadd.f32 %v239, %v242
    %vm244 = vweird.f32 %v87
    %vm245 = vweird.f32 %v239
    %vm246 = vmor %vm244, %vm245
    %v247 = vsel %vm246, %v239, %v243
    %v248 = vand.u32 2147483647, %v87
    %vm249 = vcmp.eq.f32.partialorder %v248, 8.507059e+37
    %v250 = vand.u32 %v87, 2147483648
    %v251 = vor.u32 1.1754944e-38, %v250
    %v252 = vsel %vm249, %v251, %v247
    %v253 = vmul.f32 1.0, %v252
    %v254 = vrcp.pop %v88
    %v255 = vmul.f32 %v88, %v254
    %v256 = vsub.f32 1.0, %v255
    %v257 = vmul.f32 %v254, %v256
    %v258 = vadd.f32 %v254, %v257
    %vm259 = vweird.f32 %v88
    %vm260 = vweird.f32 %v254
    %vm261 = vmor %vm259, %vm260
    %v262 = vsel %vm261, %v254, %v258
    %v263 = vand.u32 2147483647, %v88
    %vm264 = vcmp.eq.f32.partialorder %v263, 8.507059e+37
    %v265 = vand.u32 %v88, 2147483648
    %v266 = vor.u32 1.1754944e-38, %v265
    %v267 = vsel %vm264, %v266, %v262
    %v268 = vmul.f32 1.0, %v267
    %v269 = vsub.f32 %v103, 0.5
    %v270 = vsub.f32 %v118, 0.5
    %v271 = vsub.f32 %v133, 0.5
    %v272 = vsub.f32 %v148, 0.5
    %v273 = vsub.f32 %v163, 0.5
    %v274 = vsub.f32 %v178, 0.5
    %v275 = vsub.f32 %v193, 0.5
    %v276 = vsub.f32 %v208, 0.5
    %v277 = vsub.f32 %v223, 0.5
    %v278 = vsub.f32 %v238, 0.5
    %v279 = vsub.f32 %v253, 0.5
    %v280 = vsub.f32 %v268, 0.5
    %v293 = vrot.slane %v270, 4
    %v294 = vrot.slane %v272, 4
    %v295 = vrot.slane %v274, 4
    %v296 = vrot.slane %v276, 4
    %v297 = vrot.slane %v278, 4
    %v298 = vrot.slane %v280, 4
    %vm299 = vcmask 1043456
    %v300 = vsel %vm299, %v269, %v293
    %v301 = vsel %vm299, %v271, %v294
    %v302 = vsel %vm299, %v273, %v295
    %v303 = vsel %vm299, %v275, %v296
    %v304 = vsel %vm299, %v277, %v297
    %v305 = vsel %vm299, %v279, %v298
    %312 = vst [vmem:[#allocation5] sm:$0x33] %v300
    %313 = vst [vmem:[#allocation5 + $0x8] sm:$0x33] %v301
    %314 = vst [vmem:[#allocation5 + $0x10] sm:$0x33] %v302
    %315 = vst [vmem:[#allocation5 + $0x18] sm:$0x33] %v303
    %316 = vst [vmem:[#allocation5 + $0x20] sm:$0x33] %v304
    %317 = vst [vmem:[#allocation5 + $0x28] sm:$0x33] %v305
    %v330 = vrot.slane %v30, 4
    %v331 = vrot.slane %v32, 4
    %v332 = vrot.slane %v34, 4
    %v333 = vrot.slane %v36, 4
    %v334 = vrot.slane %v38, 4
    %v335 = vrot.slane %v40, 4
    %v336 = vsel %vm299, %v29, %v330
    %v337 = vsel %vm299, %v31, %v331
    %v338 = vsel %vm299, %v33, %v332
    %v339 = vsel %vm299, %v35, %v333
    %v340 = vsel %vm299, %v37, %v334
    %v341 = vsel %vm299, %v39, %v335
    %348 = vst [vmem:[#allocation5] sm:$0xcc] %v336
    %349 = vst [vmem:[#allocation5 + $0x8] sm:$0xcc] %v337
    %350 = vst [vmem:[#allocation5 + $0x10] sm:$0xcc] %v338
    %351 = vst [vmem:[#allocation5 + $0x18] sm:$0xcc] %v339
    %352 = vst [vmem:[#allocation5 + $0x20] sm:$0xcc] %v340
    %353 = vst [vmem:[#allocation5 + $0x28] sm:$0xcc] %v341
    %v366 = vrot.slane %v103, 4
    %v367 = vrot.slane %v133, 3
    %vm368 = vcmask 1041409
    %v369 = vsel %vm368, %v367, %v366
    %v370 = vrot.slane %v163, 2
    %vm371 = vcmask 1042434
    %v372 = vsel %vm371, %v370, %v369
    %v373 = vrot.slane %v193, 1
    %vm374 = vcmask 1043459
    %v375 = vsel %vm374, %v373, %v372
    %vm376 = vcmask 1044484
    %v377 = vsel %vm376, %v223, %v375
    %v378 = vrot.slane %v253, 7
    %vm379 = vcmask 1045509
    %v380 = vsel %vm379, %v378, %v377
    %v381 = vrot.slane %v118, 4
    %v382 = vrot.slane %v148, 3
    %v383 = vsel %vm368, %v382, %v381
    %v384 = vrot.slane %v178, 2
    %v385 = vsel %vm371, %v384, %v383
    %v386 = vrot.slane %v208, 1
    %v387 = vsel %vm374, %v386, %v385
    %v388 = vsel %vm376, %v238, %v387
    %v389 = vrot.slane %v268, 7
    %v390 = vsel %vm379, %v389, %v388
    %393 = vst [vmem:[#allocation6] sm:$0x3f] %v380
    %394 = vst [vmem:[#allocation6 + $0x8] sm:$0x3f] %v390
    %395 = vst.sshfl [vmem:[#allocation1] sm:$0xff pattern:$0x75316420] %v103
    %396 = vst.sshfl [vmem:[#allocation1 + $0x8] sm:$0xff pattern:$0x75316420] %v118
    %s397 = scalar_lea.vmem [#allocation1], 1
    %v398 = vld [vmem:[%s397] ss:$2 sm:$0xff]
    %399 = vst.sshfl [vmem:[#allocation1 + $0x10] sm:$0xff pattern:$0x75316420] %v133
    %400 = vst.sshfl [vmem:[#allocation1 + $0x18] sm:$0xff pattern:$0x75316420] %v148
    %s401 = scalar_lea.vmem [#allocation1], 17
    %v402 = vld [vmem:[%s401] ss:$2 sm:$0xff]
    %403 = vst.sshfl [vmem:[#allocation1 + $0x20] sm:$0xff pattern:$0x75316420] %v163
    %404 = vst.sshfl [vmem:[#allocation1 + $0x28] sm:$0xff pattern:$0x75316420] %v178
    %s405 = scalar_lea.vmem [#allocation1], 33
    %v406 = vld [vmem:[%s405] ss:$2 sm:$0xff]
    %407 = vst.sshfl [vmem:[#allocation1 + $0x30] sm:$0xff pattern:$0x75316420] %v193
    %408 = vst.sshfl [vmem:[#allocation1 + $0x38] sm:$0xff pattern:$0x75316420] %v208
    %s409 = scalar_lea.vmem [#allocation1], 49
    %v410 = vld [vmem:[%s409] ss:$2 sm:$0xff]
    %411 = vst.sshfl [vmem:[#allocation1] sm:$0xff pattern:$0x75316420] %v223
    %412 = vst.sshfl [vmem:[#allocation1 + $0x8] sm:$0xff pattern:$0x75316420] %v238
    %v413 = vld [vmem:[%s397] ss:$2 sm:$0xff]
    %414 = vst.sshfl [vmem:[#allocation1 + $0x10] sm:$0xff pattern:$0x75316420] %v253
    %415 = vst.sshfl [vmem:[#allocation1 + $0x18] sm:$0xff pattern:$0x75316420] %v268
    %v416 = vld [vmem:[%s401] ss:$2 sm:$0xff]
    %v417 = vrot.slane %v398, 5
    %v418 = vrot.slane %v417, 4
    %v419 = vrot.slane %v402, 5
    %v420 = vrot.slane %v419, 4
    %v421 = vrot.slane %v406, 5
    %v422 = vrot.slane %v421, 4
    %v423 = vrot.slane %v410, 5
    %v424 = vrot.slane %v423, 4
    %v425 = vrot.slane %v413, 5
    %v426 = vrot.slane %v425, 4
    %v427 = vrot.slane %v416, 5
    %v428 = vrot.slane %v427, 4
    %435 = vst [vmem:[#allocation8] sm:$0x77] %v418
    %436 = vst [vmem:[#allocation8 + $0x8] sm:$0x77] %v420
    %437 = vst [vmem:[#allocation8 + $0x10] sm:$0x77] %v422
    %438 = vst [vmem:[#allocation8 + $0x18] sm:$0x77] %v424
    %439 = vst [vmem:[#allocation8 + $0x20] sm:$0x77] %v426
    %440 = vst [vmem:[#allocation8 + $0x28] sm:$0x77] %v428
    // Predicated region
    $region10: #{tpu_custom_call.1} parent=1 // pred_check
      _
    $region11: #{tpu_custom_call.1} parent=1 // pred_check_branch
      %442 = sbr.rel (0) target = $region13
    $region12: #{tpu_custom_call.1} parent=1 // pred_region
      %444 = vsyncadd [#allocation4], 0
      %s445 = sshll.u32 [#allocation5], 4
      %s446 = int_to_ptr.vmem [resolvable:$true] %s445
      %s447 = sshll.u32 %s1, 4
      %s448 = int_to_ptr.hbm [resolvable:$true] %s447
      %453 = dma.vmem_to_hbm [thread:$0]  %s446, 768, %s448, [#allocation4], 128, 128, 8
    $region13: #{tpu_custom_call.1} parent=1 // pred_fallthru
      _
    // Predicated region
    $region14: #{tpu_custom_call.1} parent=1 // pred_check
      _
    $region15: #{tpu_custom_call.1} parent=1 // pred_check_branch
      %455 = sbr.rel (0) target = $region17
    $region16: #{tpu_custom_call.1} parent=1 // pred_region
      %457 = vsyncadd [#allocation7], 0
      %s459 = sshll.u32 [#allocation6], 4
      %s460 = int_to_ptr.vmem [resolvable:$true] %s459
      %s461 = sshll.u32 %s2, 4
      %s462 = int_to_ptr.hbm [resolvable:$true] %s461
      %464 = dma.vmem_to_hbm [thread:$0]  %s460, 256, %s462, [#allocation7]
    $region17: #{tpu_custom_call.1} parent=1 // pred_fallthru
      _
    // Predicated region
    $region18: #{tpu_custom_call.1} parent=1 // pred_check
      _
    $region19: #{tpu_custom_call.1} parent=1 // pred_check_branch
      %466 = sbr.rel (0) target = $region21
    $region20: #{tpu_custom_call.1} parent=1 // pred_region
      %468 = vsyncadd [#allocation7], 0
      %s469 = sshll.u32 [#allocation8], 4
      %s470 = int_to_ptr.vmem [resolvable:$true] %s469
      %s471 = sshll.u32 %s3, 4
      %s472 = int_to_ptr.hbm [resolvable:$true] %s471
      %477 = dma.vmem_to_hbm [thread:$0]  %s470, 768, %s472, [#allocation7], 128, 128, 8
    $region21: #{tpu_custom_call.1} parent=1 // pred_fallthru
      _
    // Predicated region
    $region22: #{tpu_custom_call.1} parent=1 // pred_check
      _
    $region23: #{tpu_custom_call.1} parent=1 // pred_check_branch
      %479 = sbr.rel (0) target = $region25
    $region24: #{tpu_custom_call.1} parent=1 // pred_region
      %481 = dma.done [#allocation4], 768
    $region25: #{tpu_custom_call.1} parent=1 // pred_fallthru
      _
    // Predicated region
    $region26: #{tpu_custom_call.1} parent=1 // pred_check
      _
    $region27: #{tpu_custom_call.1} parent=1 // pred_check_branch
      %483 = sbr.rel (0) target = $region29
    $region28: #{tpu_custom_call.1} parent=1 // pred_region
      %485 = dma.done [#allocation7], 256
    $region29: #{tpu_custom_call.1} parent=1 // pred_fallthru
      _
    // Predicated region
    $region30: #{tpu_custom_call.1} parent=1 // pred_check
      _
    $region31: #{tpu_custom_call.1} parent=1 // pred_check_branch
      %487 = sbr.rel (0) target = $region33
    $region32: #{tpu_custom_call.1} parent=1 // pred_region
      %489 = dma.done [#allocation7], 768
    $region33: #{tpu_custom_call.1} parent=1 // pred_fallthru
      _
    %490 = vsyncpa [#allocation3], 1
    %491 = vsyncpa [#allocation4], 1
    %492 = vsyncpa [#allocation7], 1

</llo_original>
